<compile_context>
chip_gen: v7x
topology: tpu7x:2x2x1
jax: 0.10.0
libtpu: 0.0.40
codegen_flags: <defaults>
</compile_context>

<pallas_src>
import functools

import jax
import jax.numpy as jnp
from jax.experimental import pallas as pl
from jax.experimental.pallas import tpu as pltpu


# ----------------------------- plain-JAX glue ------------------------------ #
# TODO(synk): im2col/col2im (F.unfold / F.fold) and the data-dependent
# take_along_axis gather stay as XLA glue; only the O(P^2 * D) correlation
# matmul + max/argmax reduction runs inside the Pallas kernels.

def _unfold(x, k, p, s):
    """F.unfold equivalent. x: (N, C, H, W) -> (N, C*k*k, L)."""
    N, C, H, W = x.shape
    xp = jnp.pad(x, ((0, 0), (0, 0), (p, p), (p, p)))
    oh = (H + 2 * p - k) // s + 1
    ow = (W + 2 * p - k) // s + 1
    cols = []
    for ki in range(k):
        for kj in range(k):
            cols.append(xp[:, :, ki:ki + s * oh:s, kj:kj + s * ow:s])
    out = jnp.stack(cols, axis=2)  # (N, C, k*k, oh, ow)
    return out.reshape(N, C * k * k, oh * ow)


def _unfold_rows(x, k, p, s):
    """F.unfold followed by permute(0, 2, 1): x (N,C,H,W) -> (N, L, C*k*k)."""
    N, C, H, W = x.shape
    xp = jnp.pad(x, ((0, 0), (0, 0), (p, p), (p, p)))
    oh = (H + 2 * p - k) // s + 1
    ow = (W + 2 * p - k) // s + 1
    cols = []
    for ki in range(k):
        for kj in range(k):
            cols.append(xp[:, :, ki:ki + s * oh:s, kj:kj + s * ow:s])
    out = jnp.stack(cols, axis=-1)                 # (N, C, oh, ow, k*k)
    out = jnp.transpose(out, (0, 2, 3, 1, 4))      # (N, oh, ow, C, k*k)
    return out.reshape(N, oh * ow, C * k * k)


def _fold(cols, out_hw, k, p, s):
    """F.fold equivalent (sum of overlapping patches). cols: (N, C*k*k, L)."""
    N, CKK, L = cols.shape
    C = CKK // (k * k)
    H, W = out_hw
    oh = (H + 2 * p - k) // s + 1
    ow = (W + 2 * p - k) // s + 1
    cols = cols.reshape(N, C, k, k, oh, ow)
    out = jnp.zeros((N, C, H + 2 * p, W + 2 * p), cols.dtype)
    for ki in range(k):
        for kj in range(k):
            out = out.at[:, :, ki:ki + s * oh:s, kj:kj + s * ow:s].add(
                cols[:, :, ki, kj])
    return out[:, :, p:p + H, p:p + W]


def _l2_normalize(x, axis):
    n = jnp.sqrt(jnp.sum(x * x, axis=axis, keepdims=True))
    return x / jnp.maximum(n, 1e-12)


def _round_up(x, m):
    return (x + m - 1) // m * m


def _vmem_capacity_bytes():
    """Per-core VMEM capacity (v5e/v6e: 128 MiB, v7x: 64 MiB); safe fallback."""
    try:
        info = pltpu.get_tpu_info()
        cap = int(getattr(info, "vmem_capacity_bytes", 0))
        if cap > 0:
            return cap
    except Exception:
        pass
    return 64 << 20


def _pick_tiles(P_ref, P_lr, D_pad):
    # ref-chunk rows: native 256 MXU height unless 128 reduces row padding.
    ti = 256 if _round_up(P_ref, 256) == _round_up(P_ref, 128) else 128
    ti = min(ti, _round_up(P_ref, 128))
    # lr columns per grid step: smaller tile in the small-D (VPU/XLU-bound)
    # regime to cut argmax-bookkeeping traffic, larger when the MXU dominates.
    tj = 512 if D_pad > 256 else 256
    tj = min(tj, _round_up(P_lr, 128))
    return ti, tj


# Large negative value that padded ref rows take; they can never win the max
# (correlations of L2-normalized patches live in [-1, 1]).
_MASK_VAL = -3.0e38
_BIG_I32 = 2147483647


# ------------------------------ Pallas kernels ------------------------------ #

def _corr_argmax_resident_kernel(ref_hbm, lr_ref, smax_ref, sarg_ref,
                                 ref_vmem, sem, *, ti, num_chunks, p_ref,
                                 need_mask):
    """Resident-ref path: whole normalized ref patch matrix sits in one
    single-buffered VMEM scratch, manually DMA'd from HBM once per batch.

    ref_hbm : (N, P_ref_pad, D_pad) bf16, raw HBM ref (memory_space=pl.ANY)
    lr_ref  : (D_pad, tj) bf16      -- one tile of lr patch columns
    """
    b = pl.program_id(0)
    j = pl.program_id(1)

    @pl.when(j == 0)
    def _load_ref():  # one ref DMA per batch, single buffer
        cp = pltpu.make_async_copy(ref_hbm.at[b], ref_vmem, sem)
        cp.start()
        cp.wait()

    tj = lr_ref.shape[-1]
    lr = lr_ref[...]                                     # (D_pad, tj)
    # Hoisted loop invariants (JAX does not CSE broadcast_in_dim).
    iota_rows = jax.lax.broadcasted_iota(jnp.int32, (ti, tj), 0)
    big = jnp.int32(_BIG_I32)

    def chunk(base, run_max, run_arg, mask_rows, valid_rows):
        r = jnp.dot(ref_vmem[pl.ds(base, ti), :], lr,
                    preferred_element_type=jnp.float32)   # (ti, tj) f32
        if mask_rows:  # only the statically peeled last chunk pays this
            r = jnp.where(iota_rows >= valid_rows, _MASK_VAL, r)
        tile_max = jnp.max(r, axis=0, keepdims=True)       # (1, tj)
        local_arg = jnp.min(jnp.where(r == tile_max, iota_rows, big),
                            axis=0, keepdims=True)         # (1, tj)
        tile_arg = local_arg + base                        # global row id
        better = tile_max > run_max
        return (jnp.where(better, tile_max, run_max),
                jnp.where(better, tile_arg, run_arg))

    init = (jnp.full((1, tj), -jnp.inf, jnp.float32),
            jnp.zeros((1, tj), jnp.int32))
    main_chunks = num_chunks - 1 if need_mask else num_chunks

    def body(c, carry):
        base = pl.multiple_of(c * ti, ti)
        return chunk(base, carry[0], carry[1], False, ti)

    if main_chunks > 0:
        unroll = main_chunks if main_chunks <= 4 else 2
        run_max, run_arg = jax.lax.fori_loop(0, main_chunks, body, init,
                                             unroll=unroll)
    else:
        run_max, run_arg = init

    if need_mask:  # padded ref rows exist only in the last chunk
        base = (num_chunks - 1) * ti
        run_max, run_arg = chunk(base, run_max, run_arg, True, p_ref - base)

    smax_ref[...] = run_max.reshape(smax_ref.shape)
    sarg_ref[...] = run_arg.reshape(sarg_ref.shape)


def _corr_argmax_stream_kernel(ref_ref, lr_ref, smax_ref, sarg_ref,
                               max_sc, arg_sc, *, ti, p_ref, need_mask):
    """Streaming fallback: ref chunks as innermost 'arbitrary' grid axis, with
    the running max/argmax carried in VMEM scratch (for ref blocks too large
    to keep resident, e.g. on v7x's 64 MiB VMEM)."""
    c = pl.program_id(2)

    @pl.when(c == 0)
    def _init():
        max_sc[...] = jnp.full_like(max_sc, -jnp.inf)
        arg_sc[...] = jnp.zeros_like(arg_sc)

    r = jnp.dot(ref_ref[...], lr_ref[...],
                preferred_element_type=jnp.float32)        # (ti, tj) f32
    iota_rows = jax.lax.broadcasted_iota(jnp.int32, r.shape, 0)
    base = c * ti
    if need_mask:
        r = jnp.where(iota_rows + base >= p_ref, _MASK_VAL, r)
    tile_max = jnp.max(r, axis=0, keepdims=True)
    big = jnp.int32(_BIG_I32)
    local_arg = jnp.min(jnp.where(r == tile_max, iota_rows, big),
                        axis=0, keepdims=True)
    tile_arg = local_arg + base
    better = tile_max > max_sc[...]
    max_sc[...] = jnp.where(better, tile_max, max_sc[...])
    arg_sc[...] = jnp.where(better, tile_arg, arg_sc[...])

    @pl.when(c == pl.num_programs(2) - 1)
    def _finalize():
        smax_ref[...] = max_sc[...].reshape(smax_ref.shape)
        sarg_ref[...] = arg_sc[...].reshape(sarg_ref.shape)


def corr_argmax(ref_n, lr_n, *, force_streaming=False):
    """max_i / argmax_i of bmm(ref_n, lr_n) over the ref-position axis.

    ref_n: (N, P_ref, D), lr_n: (N, D, P_lr)
    returns (R_star (N, P_lr) f32, R_arg (N, P_lr) i32)
    """
    N, P_ref, D = ref_n.shape
    N2, D2, P_lr = lr_n.shape
    assert D == D2 and N == N2

    D_pad = _round_up(D, 128)
    ti, tj = _pick_tiles(P_ref, P_lr, D_pad)
    P_ref_pad = _round_up(P_ref, ti)
    P_lr_pad = _round_up(P_lr, tj)
    need_mask = P_ref_pad > P_ref
    num_chunks = P_ref_pad // ti

    cdt = jnp.bfloat16
    # Avoid materializing padded copies when no padding is needed.
    if P_ref_pad == P_ref and D_pad == D:
        ref_p = ref_n.astype(cdt)
    else:
        ref_p = jnp.zeros((N, P_ref_pad, D_pad), cdt)
        ref_p = ref_p.at[:, :P_ref, :D].set(ref_n.astype(cdt))
    if P_lr_pad == P_lr and D_pad == D:
        lr_p = lr_n.astype(cdt)
    else:
        lr_p = jnp.zeros((N, D_pad, P_lr_pad), cdt)
        lr_p = lr_p.at[:, :D, :P_lr].set(lr_n.astype(cdt))

    vmem_cap = int(0.85 * _vmem_capacity_bytes())
    r_bytes = ti * tj * 4
    out_bytes = 2 * 2 * tj * (4 + 4)
    resident_need = (P_ref_pad * D_pad * 2          # single-buffered ref block
                     + 2 * D_pad * tj * 2           # double-buffered lr tile
                     + out_bytes + 3 * r_bytes + (4 << 20))
    use_resident = (not force_streaming) and resident_need <= vmem_cap

    out_shapes = (jax.ShapeDtypeStruct((N, 1, P_lr_pad), jnp.float32),
                  jax.ShapeDtypeStruct((N, 1, P_lr_pad), jnp.int32))

    if use_resident:
        vmem_limit = int(min(max(resident_need, 32 << 20), vmem_cap))
        kernel = functools.partial(
            _corr_argmax_resident_kernel, ti=ti, num_chunks=num_chunks,
            p_ref=P_ref, need_mask=need_mask)
        smax, sarg = pl.pallas_call(
            kernel,
            out_shape=out_shapes,
            grid_spec=pltpu.PrefetchScalarGridSpec(
                num_scalar_prefetch=0,
                grid=(N, P_lr_pad // tj),
                in_specs=[
                    pl.BlockSpec(memory_space=pl.ANY),    # ref stays in HBM
                    pl.BlockSpec((None, D_pad, tj), lambda b, j: (b, 0, j)),
                ],
                out_specs=[
                    pl.BlockSpec((1, 1, tj), lambda b, j: (b, 0, j)),
                    pl.BlockSpec((1, 1, tj), lambda b, j: (b, 0, j)),
                ],
                scratch_shapes=[
                    pltpu.VMEM((P_ref_pad, D_pad), cdt),  # single buffer
                    pltpu.SemaphoreType.DMA,
                ]),
            compiler_params=pltpu.CompilerParams(
                # j marked 'arbitrary' so a 2-TC chip splits the batch axis and
                # never DMAs the same ref block on both cores.
                dimension_semantics=("parallel", "arbitrary"),
                vmem_limit_bytes=vmem_limit),
        )(ref_p, lr_p)
    else:
        stream_need = (2 * ti * D_pad * 2 + 2 * D_pad * tj * 2 + out_bytes
                       + 2 * tj * (4 + 4) + 3 * r_bytes + (4 << 20))
        vmem_limit = int(min(max(stream_need, 32 << 20), vmem_cap))
        kernel = functools.partial(
            _corr_argmax_stream_kernel, ti=ti, p_ref=P_ref,
            need_mask=need_mask)
        smax, sarg = pl.pallas_call(
            kernel,
            out_shape=out_shapes,
            grid_spec=pltpu.PrefetchScalarGridSpec(
                num_scalar_prefetch=0,
                grid=(N, P_lr_pad // tj, num_chunks),
                in_specs=[
                    pl.BlockSpec((None, ti, D_pad), lambda b, j, c: (b, c, 0)),
                    pl.BlockSpec((None, D_pad, tj), lambda b, j, c: (b, 0, j)),
                ],
                out_specs=[
                    pl.BlockSpec((1, 1, tj), lambda b, j, c: (b, 0, j)),
                    pl.BlockSpec((1, 1, tj), lambda b, j, c: (b, 0, j)),
                ],
                scratch_shapes=[
                    pltpu.VMEM((1, tj), jnp.float32),
                    pltpu.VMEM((1, tj), jnp.int32),
                ]),
            compiler_params=pltpu.CompilerParams(
                dimension_semantics=("parallel", "parallel", "arbitrary"),
                vmem_limit_bytes=vmem_limit),
        )(ref_p, lr_p)

    return smax[:, 0, :P_lr], sarg[:, 0, :P_lr]


# ------------------------------ forward pass ------------------------------- #

def search_transfer(lrsr_lv3, refsr_lv3, ref_lv1, ref_lv2, ref_lv3,
                    use_pallas=True):
    N, C, H, W = lrsr_lv3.shape

    lr_unf = _unfold(lrsr_lv3, 3, 1, 1)                # (N, C*9, P_lr)
    refsr_rows = _unfold_rows(refsr_lv3, 3, 1, 1)      # (N, P_ref, C*9)
    # L2-normalized correlations live in [-1, 1]: bf16 operands are safe for
    # the ranking; the matmul still accumulates in f32.
    refsr_n = _l2_normalize(refsr_rows, axis=2).astype(jnp.bfloat16)
    lr_n = _l2_normalize(lr_unf, axis=1).astype(jnp.bfloat16)

    if use_pallas:
        R_star, R_arg = corr_argmax(refsr_n, lr_n)
    else:  # pure-JAX reference path (same bf16 operands, f32 accumulate)
        R = jnp.einsum('npd,ndq->npq', refsr_n, lr_n,
                       preferred_element_type=jnp.float32)
        R_star = jnp.max(R, axis=1)
        R_arg = jnp.argmax(R, axis=1).astype(jnp.int32)

    # TODO(synk): if the gather + fold path ever dominates end-to-end, move the
    # gather into a Pallas kernel with scalar-prefetched R_arg + pl.Element.
    ref3_unf = _unfold(ref_lv3, 3, 1, 1)
    ref2_unf = _unfold(ref_lv2, 6, 2, 2)
    ref1_unf = _unfold(ref_lv1, 12, 4, 4)

    def bis(inp, idx):  # gather along the patch-position axis (dim=2)
        return jnp.take_along_axis(inp, idx[:, None, :].astype(jnp.int32),
                                   axis=2)

    T3u = bis(ref3_unf, R_arg)
    T2u = bis(ref2_unf, R_arg)
    T1u = bis(ref1_unf, R_arg)

    T_lv3 = _fold(T3u, (H, W), 3, 1, 1) / 9.0
    T_lv2 = _fold(T2u, (2 * H, 2 * W), 6, 2, 2) / 9.0
    T_lv1 = _fold(T1u, (4 * H, 4 * W), 12, 4, 4) / 9.0
    S = R_star.reshape(N, 1, H, W)
    return S, T_lv3, T_lv2, T_lv1


# ---------------------------------- main ----------------------------------- #

if __name__ == "__main__":
    key = jax.random.PRNGKey(0)
    k1, k2, k3, k4, k5, k6, k7 = jax.random.split(key, 7)
    N, C, H, W = 2, 4, 16, 16
    lrsr_lv3 = jax.random.normal(k1, (N, C, H, W), jnp.float32)
    refsr_lv3 = jax.random.normal(k2, (N, C, H, W), jnp.float32)
    ref_lv3 = jax.random.normal(k3, (N, C, H, W), jnp.float32)
    ref_lv2 = jax.random.normal(k4, (N, C, 2 * H, 2 * W), jnp.float32)
    ref_lv1 = jax.random.normal(k5, (N, C, 4 * H, 4 * W), jnp.float32)

    fwd = jax.jit(functools.partial(search_transfer, use_pallas=True))
    S, T3, T2, T1 = fwd(lrsr_lv3, refsr_lv3, ref_lv1, ref_lv2, ref_lv3)
    jax.block_until_ready((S, T3, T2, T1))

    # cross-check against the pure-JAX reference path
    Sr, T3r, T2r, T1r = jax.jit(
        functools.partial(search_transfer, use_pallas=False))(
        lrsr_lv3, refsr_lv3, ref_lv1, ref_lv2, ref_lv3)
    jax.block_until_ready((Sr, T3r, T2r, T1r))
    assert jnp.max(jnp.abs(S - Sr)) < 1e-3
    assert jnp.max(jnp.abs(T3 - T3r)) < 1e-3
    assert jnp.max(jnp.abs(T2 - T2r)) < 1e-3
    assert jnp.max(jnp.abs(T1 - T1r)) < 1e-3

    # direct kernel check at non-tile-multiple sizes (exercises the in-kernel
    # padded-row mask and the multi-chunk loop) for both the resident path and
    # the streaming fallback path.
    P_ref, P_lr, D = 300, 200, 36
    ref_rows = _l2_normalize(
        jax.random.normal(k6, (N, P_ref, D), jnp.float32), axis=2)
    lr_cols = _l2_normalize(
        jax.random.normal(k7, (N, D, P_lr), jnp.float32), axis=1)
    ref_b = ref_rows.astype(jnp.bfloat16)
    lr_b = lr_cols.astype(jnp.bfloat16)
    R = jnp.einsum('npd,ndq->npq', ref_b, lr_b,
                   preferred_element_type=jnp.float32)
    R_max = jnp.max(R, axis=1)
    for force in (False, True):
        sm, sa = jax.jit(functools.partial(corr_argmax,
                                           force_streaming=force))(ref_b, lr_b)
        jax.block_until_ready((sm, sa))
        assert jnp.max(jnp.abs(sm - R_max)) < 1e-3
        gathered = jnp.take_along_axis(R, sa[:, None, :].astype(jnp.int32),
                                       axis=1)[:, 0, :]
        assert jnp.max(jnp.abs(gathered - R_max)) < 1e-3
        assert bool(jnp.all((sa >= 0) & (sa < P_ref)))

    print("KERNEL_OK")
</pallas_src>

<mosaic_0001>
module attributes {stable_mosaic.version = 11 : i64} {
  func.func @_corr_argmax_resident_kernel(%arg0: i32, %arg1: i32, %arg2: memref<2x256x128xbf16, #tpu.memory_space<any>>, %arg3: memref<1x128x256xbf16, #tpu.memory_space<vmem>>, %arg4: memref<1x1x256xf32, #tpu.memory_space<vmem>>, %arg5: memref<1x1x256xi32, #tpu.memory_space<vmem>>, %arg6: memref<256x128xbf16, #tpu.memory_space<vmem>>, %arg7: memref<!tpu.dma_semaphore, #tpu.memory_space<semaphore_mem>>) attributes {dimension_semantics = [#tpu.dimension_semantics<parallel>, #tpu.dimension_semantics<arbitrary>], iteration_bounds = array<i64: 2, 1>, scalar_prefetch = 0 : i64, scratch_operands = 2 : i64, tpu.core_type = #tpu.core_type<tc>, window_params = [{}, {transform_indices = @transform_1, window_bounds = array<i64: 1, 128, 256>}, {transform_indices = @transform_2, window_bounds = array<i64: 1, 1, 256>}, {transform_indices = @transform_3, window_bounds = array<i64: 1, 1, 256>}]} {
    %c0_i32 = arith.constant 0 : i32
    %0 = arith.cmpi eq, %arg1, %c0_i32 : i32
    %1 = arith.extui %0 : i1 to i32
    %c0_i32_0 = arith.constant 0 : i32
    %2 = arith.cmpi ne, %1, %c0_i32_0 : i32
    scf.if %2 {
      %c0_i32_15 = arith.constant 0 : i32
      %c0_i32_16 = arith.constant 0 : i32
      %30 = tpu.memref_slice %arg2[%arg0, %c0_i32_15, %c0_i32_16] : memref<2x256x128xbf16, #tpu.memory_space<any>> -> memref<1x256x128xbf16, #tpu.memory_space<any>>
      %31 = tpu.memref_squeeze %30 : memref<1x256x128xbf16, #tpu.memory_space<any>> -> memref<256x128xbf16, #tpu.memory_space<any>>
      tpu.enqueue_dma source(%31 : memref<256x128xbf16, #tpu.memory_space<any>>) target(%arg6 : memref<256x128xbf16, #tpu.memory_space<vmem>>) target_semaphore(%arg7 : memref<!tpu.dma_semaphore, #tpu.memory_space<semaphore_mem>>)
      %c0_i32_17 = arith.constant 0 : i32
      %c0_i32_18 = arith.constant 0 : i32
      %32 = tpu.memref_slice %arg2[%arg0, %c0_i32_17, %c0_i32_18] : memref<2x256x128xbf16, #tpu.memory_space<any>> -> memref<1x256x128xbf16, #tpu.memory_space<any>>
      %33 = tpu.memref_squeeze %32 : memref<1x256x128xbf16, #tpu.memory_space<any>> -> memref<256x128xbf16, #tpu.memory_space<any>>
      tpu.wait_dma2 semaphore(%arg7 : memref<!tpu.dma_semaphore, #tpu.memory_space<semaphore_mem>>) src(%33 : memref<256x128xbf16, #tpu.memory_space<any>>) dst(%arg6 : memref<256x128xbf16, #tpu.memory_space<vmem>>)
    } else {
    }
    %c0 = arith.constant 0 : index
    %c0_1 = arith.constant 0 : index
    %c0_2 = arith.constant 0 : index
    %3 = vector.load %arg3[%c0, %c0_1, %c0_2] : memref<1x128x256xbf16, #tpu.memory_space<vmem>>, vector<1x128x256xbf16>
    %4 = vector.shape_cast %3 : vector<1x128x256xbf16> to vector<128x256xbf16>
    %5 = tpu.iota {dimensions = array<i32: 0>} : vector<256x256xi32>
    %cst = arith.constant 0xFF800000 : f32
    %6 = vector.broadcast %cst : f32 to vector<1x256xf32>
    %c0_i32_3 = arith.constant 0 : i32
    %7 = vector.broadcast %c0_i32_3 : i32 to vector<1x256xi32>
    %c2147483647_i32 = arith.constant 2147483647 : i32
    %c0_i32_4 = arith.constant 0 : i32
    %c256_i32 = arith.constant 256 : i32
    %8 = arith.muli %c0_i32_4, %c256_i32 : i32
    %9 = tpu.assume_multiple %8, 256 : i32
    %10 = arith.index_cast %9 : i32 to index
    %c0_5 = arith.constant 0 : index
    %11 = vector.load %arg6[%10, %c0_5] : memref<256x128xbf16, #tpu.memory_space<vmem>>, vector<256x128xbf16>
    %cst_6 = arith.constant dense<0.000000e+00> : vector<256x256xf32>
    %12 = tpu.matmul %11, %4, %cst_6 {dimension_numbers = #tpu.dot_dimension_numbers<[1], [0], [0], [1], [0, 0, 1, 1], [], []>} : vector<256x128xbf16>, vector<128x256xbf16>, vector<256x256xf32> -> vector<256x256xf32>
    %cst_7 = arith.constant dense<0xFF800000> : vector<256xf32>
    %13 = vector.multi_reduction <maximumf>, %12, %cst_7 [0] : vector<256x256xf32> to vector<256xf32>
    %14 = vector.shape_cast %13 : vector<256xf32> to vector<1x256xf32>
    %15 = vector.broadcast %14 : vector<1x256xf32> to vector<256x256xf32>
    %16 = arith.cmpf oeq, %12, %15 : vector<256x256xf32>
    %17 = vector.broadcast %c2147483647_i32 : i32 to vector<256x256xi32>
    %18 = arith.select %16, %5, %17 : vector<256x256xi1>, vector<256x256xi32>
    %cst_8 = arith.constant dense<2147483647> : vector<256xi32>
    %19 = vector.multi_reduction <minsi>, %18, %cst_8 [0] : vector<256x256xi32> to vector<256xi32>
    %20 = vector.shape_cast %19 : vector<256xi32> to vector<1x256xi32>
    %21 = vector.broadcast %9 : i32 to vector<1x256xi32>
    %22 = arith.addi %20, %21 : vector<1x256xi32>
    %23 = arith.cmpf ogt, %14, %6 : vector<1x256xf32>
    %24 = arith.select %23, %14, %6 : vector<1x256xi1>, vector<1x256xf32>
    %25 = arith.select %23, %22, %7 : vector<1x256xi1>, vector<1x256xi32>
    %c1_i32 = arith.constant 1 : i32
    %26 = vector.shape_cast %24 : vector<1x256xf32> to vector<1x1x256xf32>
    %c0_9 = arith.constant 0 : index
    %c0_10 = arith.constant 0 : index
    %c0_11 = arith.constant 0 : index
    %27 = vector.load %arg4[%c0_9, %c0_10, %c0_11] : memref<1x1x256xf32, #tpu.memory_space<vmem>>, vector<1x1x256xf32>
    tpu.vector_store %arg4[%c0_9, %c0_10, %c0_11], %26 {strides = array<i32>} : memref<1x1x256xf32, #tpu.memory_space<vmem>>, vector<1x1x256xf32>,
    %28 = vector.shape_cast %25 : vector<1x256xi32> to vector<1x1x256xi32>
    %c0_12 = arith.constant 0 : index
    %c0_13 = arith.constant 0 : index
    %c0_14 = arith.constant 0 : index
    %29 = vector.load %arg5[%c0_12, %c0_13, %c0_14] : memref<1x1x256xi32, #tpu.memory_space<vmem>>, vector<1x1x256xi32>
    tpu.vector_store %arg5[%c0_12, %c0_13, %c0_14], %28 {strides = array<i32>} : memref<1x1x256xi32, #tpu.memory_space<vmem>>, vector<1x1x256xi32>,
    return
  }
  func.func @transform_1(%arg0: i32, %arg1: i32) -> (i32, i32, i32) {
    %c0_i32 = arith.constant 0 : i32
    %c0_i32_0 = arith.constant 0 : i32
    return %arg0, %c0_i32, %arg1 : i32, i32, i32
  }
  func.func @transform_2(%arg0: i32, %arg1: i32) -> (i32, i32, i32) {
    %c0_i32 = arith.constant 0 : i32
    %c0_i32_0 = arith.constant 0 : i32
    return %arg0, %c0_i32, %arg1 : i32, i32, i32
  }
  func.func @transform_3(%arg0: i32, %arg1: i32) -> (i32, i32, i32) {
    %c0_i32 = arith.constant 0 : i32
    %c0_i32_0 = arith.constant 0 : i32
    return %arg0, %c0_i32, %arg1 : i32, i32, i32
  }
}

</mosaic_0001>

<llo_original>
// kernel: search_transfer.1
$region0: #{search_transfer.1}
  #allocation0 [shape = 'u32[]', space=smem, size = 0x4, offset = 0x4, fixed_abs, tag = 'smem constant byte address 0x4 - core index']
  #allocation1 [shape = 'u32[144,128]{1,0:T(1,128)}', space=vmem, size = 0x12000, scoped, tag = 'internal scratch']
  #allocation2 [shape = 'bf16[256,128]{1,0:T(16,128)(2,1)}', space=vmem, size = 0x10000, scoped, tag = 'scratch operand']
  #allocation3 [shape = 's32[1]{0}', space=sflag, size = 0x4, scoped, tag = 'scratch operand']
  #allocation4 [shape = 's32[]', space=sflag, size = 0x4, offset = 0, fixed_abs, tag = 'sflag constant byte address 0x0 - dummy sync flag']
  %s0 = inlined_call_operand.vmem [shape: bf16[2,256,128], index: 0, kind: input, shape index: {}]
  %s1 = inlined_call_operand.vmem [shape: bf16[2,128,256], index: 1, kind: input, shape index: {}]
  %s2 = inlined_call_operand.vmem [shape: f32[2,1,256], index: 2, kind: output, shape index: {0}]
  %s3 = inlined_call_operand.vmem [shape: s32[2,1,256], index: 3, kind: output, shape index: {1}]
  %4 = xla_tuple %s2, %s3
  %s5 = sld [smem:[#allocation0]]
  $region83: #{search_transfer.1} parent=0
    _
  %s7 = ssub.s32 1, %s5
  %s8 = scalar_select 0, %s7, %s5
  loop: start=0, step=1, limit=4
  $region2: #{search_transfer.1} parent=0 // loop_pre_header
    _
  $region3: #{search_transfer.1} parent=0 // loop_header
    %s10 = sphi 0, %s14
    %p11 = scmp.ge.s32.totalorder %s10, 4
    %s17 = sphi 0, %s29
    %s18 = sphi 0, %s25
    %s19 = sphi 0, %s17
    %s20 = sphi 0, %s18
    %s21 = sphi 0, %s19
    %s22 = sphi 0, %s20
    %s34 = sphi 0, %s36
    %s37 = sphi 0, %s34
    %s38 = sphi 0, %s37
    %s54 = sphi 0, %s38
    %s62 = sphi 0, %s64
    %s65 = sphi 0, %s62
    %s66 = sphi 0, %s65
    %s82 = sphi 0, %s66
    %s90 = sphi 0, %s92
    %s93 = sphi 0, %s90
    %s94 = sphi 0, %s93
    %s110 = sphi 0, %s94
  $region4: #{search_transfer.1} parent=0 // loop_header_branch
    %13 = sbr.rel (%p11) target = $region8
  $region5: #{search_transfer.1} parent=0 // loop_body
    %s15 = ssub.s32 %s10, 1
    %s16 = ssub.s32 %s10, 2
    %s23 = sadd.s32 1, %s18
    %p24 = scmp.ge.s32.totalorder %s23, 1
    %s25 = scalar_select %p24, 0, %s23
    %s26 = sadd.s32 1, %s17
    %s27 = scalar_select %p24, %s26, %s17
    %p28 = scmp.ge.s32.totalorder %s27, 2
    %s29 = scalar_select %p28, 0, %s27
    %s30 = ssub.s32 %s17, %s29
    %s31 = ssub.s32 %s18, %s25
    %s32 = sor.u32 %s30, %s31
    %p33 = scmp.eq.s32.totalorder %s32, 0
    %s35 = sadd.s32 %s34, 1
    %s36 = scalar_select %p33, %s34, %s35
    %p39 = pneg %p33
    %p40 = scmp.eq.s32.totalorder %s10, 1
    %p41 = por %p39, %p40
    %p42 = scmp.ne.s32.totalorder %s34, %s37
    %p43 = scmp.eq.s32.totalorder %s10, 0
    %p44 = por %p42, %p43
    %p45 = scmp.ne.s32.totalorder %s34, %s37
    %p46 = scmp.eq.s32.totalorder %s15, 1
    %p47 = por %p45, %p46
    %p48 = scmp.ne.s32.totalorder %s37, %s38
    %p49 = scmp.eq.s32.totalorder %s15, 0
    %p50 = por %p48, %p49
    %p51 = scmp.ne.s32.totalorder %s37, %s38
    %p52 = scmp.eq.s32.totalorder %s16, 1
    %p53 = por %p51, %p52
    %p55 = scmp.ne.s32.totalorder %s38, %s54
    %p56 = scmp.eq.s32.totalorder %s16, 0
    %p57 = por %p55, %p56
    %s58 = ssub.s32 %s17, %s29
    %s59 = ssub.s32 %s18, %s25
    %s60 = sor.u32 %s58, %s59
    %p61 = scmp.eq.s32.totalorder %s60, 0
    %s63 = sadd.s32 %s62, 1
    %s64 = scalar_select %p61, %s62, %s63
    %p67 = pneg %p61
    %p68 = scmp.eq.s32.totalorder %s10, 1
    %p69 = por %p67, %p68
    %p70 = scmp.ne.s32.totalorder %s62, %s65
    %p71 = scmp.eq.s32.totalorder %s10, 0
    %p72 = por %p70, %p71
    %p73 = scmp.ne.s32.totalorder %s62, %s65
    %p74 = scmp.eq.s32.totalorder %s15, 1
    %p75 = por %p73, %p74
    %p76 = scmp.ne.s32.totalorder %s65, %s66
    %p77 = scmp.eq.s32.totalorder %s15, 0
    %p78 = por %p76, %p77
    %p79 = scmp.ne.s32.totalorder %s65, %s66
    %p80 = scmp.eq.s32.totalorder %s16, 1
    %p81 = por %p79, %p80
    %p83 = scmp.ne.s32.totalorder %s66, %s82
    %p84 = scmp.eq.s32.totalorder %s16, 0
    %p85 = por %p83, %p84
    %s86 = ssub.s32 %s17, %s29
    %s87 = ssub.s32 %s18, %s25
    %s88 = sor.u32 %s86, %s87
    %p89 = scmp.eq.s32.totalorder %s88, 0
    %s91 = sadd.s32 %s90, 1
    %s92 = scalar_select %p89, %s90, %s91
    %p95 = pneg %p89
    %p96 = scmp.eq.s32.totalorder %s10, 1
    %p97 = por %p95, %p96
    %p98 = scmp.ne.s32.totalorder %s90, %s93
    %p99 = scmp.eq.s32.totalorder %s10, 0
    %p100 = por %p98, %p99
    %p101 = scmp.ne.s32.totalorder %s90, %s93
    %p102 = scmp.eq.s32.totalorder %s15, 1
    %p103 = por %p101, %p102
    %p104 = scmp.ne.s32.totalorder %s93, %s94
    %p105 = scmp.eq.s32.totalorder %s15, 0
    %p106 = por %p104, %p105
    %p107 = scmp.ne.s32.totalorder %s93, %s94
    %p108 = scmp.eq.s32.totalorder %s16, 1
    %p109 = por %p107, %p108
    %p111 = scmp.ne.s32.totalorder %s94, %s110
    %p112 = scmp.eq.s32.totalorder %s16, 0
    %p113 = por %p111, %p112
    %p114 = scmp.le.s32.totalorder 1, %s10
    %p115 = scmp.lt.s32.totalorder %s10, 3
    %p116 = pnand %p114, %p115
    %p117 = pneg %p116
    // Predicated region
    $region9: #{search_transfer.1} parent=5 // pred_check
      _
    $region10: #{search_transfer.1} parent=5 // pred_check_branch
      %119 = sbr.rel (%p116) target = $region12
    $region11: #{search_transfer.1} parent=5 // pred_region
      %s120 = ssub.s32 %s10, 1
    $region12: #{search_transfer.1} parent=5 // pred_fallthru
      _
    %p121 = scmp.lt.s32.totalorder %s10, 2
    // Predicated region
    $region13: #{search_transfer.1} parent=5 // pred_check
      %p122 = pneg %p121
    $region14: #{search_transfer.1} parent=5 // pred_check_branch
      %124 = sbr.rel (%p122) target = $region16
    $region15: #{search_transfer.1} parent=5 // pred_region
      // Predicated region
      $region17: #{search_transfer.1} parent=15 // pred_check
        %p125 = pneg %p44
      $region18: #{search_transfer.1} parent=15 // pred_check_branch
        %127 = sbr.rel (%p125) target = $region20
      $region19: #{search_transfer.1} parent=15 // pred_region
        %s128 = smul.u32 2, %s18
        %p129 = scmp.lt.s32.totalorder %s17, 1
        %s130 = scalar_select %p129, %s17, 1
        %p131 = scmp.lt.s32.totalorder %s128, 1
        %s132 = scalar_select %p131, %s128, 1
        %s133 = smul.addr %s130, 32
        %s134 = sadd.s32 %s132, %s133
        %s135 = smul.addr %s134, 4
        %s136 = scalar_lea.vmem %s1, %s135
        %s137 = smul.u32 2, %s18
      $region20: #{search_transfer.1} parent=15 // pred_fallthru
        _
    $region16: #{search_transfer.1} parent=5 // pred_fallthru
      _
    %p138 = scmp.le.s32.totalorder 1, %s10
    %p139 = scmp.lt.s32.totalorder %s10, 3
    %p140 = pnand %p138, %p139
    %p141 = pneg %p140
    // Predicated region
    $region21: #{search_transfer.1} parent=5 // pred_check
      _
    $region22: #{search_transfer.1} parent=5 // pred_check_branch
      %143 = sbr.rel (%p140) target = $region24
    $region23: #{search_transfer.1} parent=5 // pred_region
      %s144 = ssub.s32 %s10, 1
      %s145 = smul.u32 2, %s20
      %p146 = scmp.lt.s32.totalorder %s19, 1
      %s147 = scalar_select %p146, %s19, 1
      %p148 = scmp.lt.s32.totalorder %s145, 1
      %s149 = scalar_select %p148, %s145, 1
      %s150 = smul.addr %s147, 32
      %s151 = sadd.s32 %s149, %s150
      %s152 = smul.addr %s151, 4
      %s153 = scalar_lea.vmem %s1, %s152
      %p154 = pneg %p50
      %p155 = pneg %p47
      %p156 = pneg %p78
      %p157 = pneg %p75
      %s158 = smul.u32 2, %s20
      %p159 = scmp.lt.s32.totalorder %s19, 1
      %s160 = scalar_select %p159, %s19, 1
      %p161 = scmp.lt.s32.totalorder %s158, 1
      %s162 = scalar_select %p161, %s158, 1
      %s163 = smul.addr %s160, 2
      %s164 = sadd.s32 %s162, %s163
      %s165 = scalar_lea.vmem %s2, %s164
      %p166 = pneg %p106
      %p167 = pneg %p103
      %s168 = smul.u32 2, %s20
      %p169 = scmp.lt.s32.totalorder %s19, 1
      %s170 = scalar_select %p169, %s19, 1
      %p171 = scmp.lt.s32.totalorder %s168, 1
      %s172 = scalar_select %p171, %s168, 1
      %s173 = smul.addr %s170, 2
      %s174 = sadd.s32 %s172, %s173
      %s175 = scalar_lea.vmem %s3, %s174
      %s176 = smul.u32 2, %s20
      %p177 = scmp.lt.s32.totalorder %s19, 1
      %s178 = scalar_select %p177, %s19, 1
      %p179 = scmp.lt.s32.totalorder %s176, 1
      %s180 = scalar_select %p179, %s176, 1
      %s181 = smul.addr %s178, 32
      %s182 = sadd.s32 %s180, %s181
      %s183 = smul.addr %s182, 4
      %s184 = scalar_lea.vmem %s1, %s183
      %s185 = smul.u32 2, %s20
      %s186 = smul.u32 2, %s20
      %p187 = scmp.lt.s32.totalorder %s19, 1
      %s188 = scalar_select %p187, %s19, 1
      %p189 = scmp.lt.s32.totalorder %s186, 1
      %s190 = scalar_select %p189, %s186, 1
      %s191 = smul.addr %s188, 2
      %s192 = sadd.s32 %s190, %s191
      %s193 = scalar_lea.vmem %s2, %s192
      %s194 = smul.u32 2, %s20
      %s195 = smul.u32 2, %s20
      %p196 = scmp.lt.s32.totalorder %s19, 1
      %s197 = scalar_select %p196, %s19, 1
      %p198 = scmp.lt.s32.totalorder %s195, 1
      %s199 = scalar_select %p198, %s195, 1
      %s200 = smul.addr %s197, 2
      %s201 = sadd.s32 %s199, %s200
      %s202 = scalar_lea.vmem %s3, %s201
      %s203 = smul.u32 2, %s20
      %p205 = scmp.eq.s32.totalorder %s20, 0
      // Predicated region
      $region25: #{search_transfer.1} parent=23 // pred_check
        %p206 = pneg %p205
      $region26: #{search_transfer.1} parent=23 // pred_check_branch
        %208 = sbr.rel (%p206) target = $region28
      $region27: #{search_transfer.1} parent=23 // pred_region
        %s209 = smul.u32 %s19, 32
        %s210 = smul.addr %s209, 4
        %s211 = scalar_lea.vmem %s0, %s210
        %p213 = scmp.lt.u32.totalorder 128, 8
        %p214 = pneg %p213
        // Predicated region
        $region29: #{search_transfer.1} parent=27 // pred_check
          _
        $region30: #{search_transfer.1} parent=27 // pred_check_branch
          %216 = sbr.rel (%p213) target = $region32
        $region31: #{search_transfer.1} parent=27 // pred_region
          %s231 = sand.u32 128, 7
          %p232 = scmp.eq.s32.totalorder %s231, 0
          // Predicated region
          $region44: #{search_transfer.1} parent=31 // pred_check
            %p233 = pneg %p232
          $region45: #{search_transfer.1} parent=31 // pred_check_branch
            %235 = sbr.rel (%p233) target = $region47
          $region46: #{search_transfer.1} parent=31 // pred_region
            loop: start=0, step=1, limit=1
            $region48: #{search_transfer.1} parent=46 // loop_pre_header
              _
            $region49: #{search_transfer.1} parent=46 // loop_header
              %s237 = sphi 0, %s241
              %p238 = scmp.ge.s32.totalorder %s237, 1
              %s242 = sphi %s211, %s211
              %s243 = sphi [#allocation2], [#allocation2]
            $region50: #{search_transfer.1} parent=46 // loop_header_branch
              %240 = sbr.rel (%p238) target = $region54
            $region51: #{search_transfer.1} parent=46 // loop_body
              %v244 = vld [vmem:[%s242] sm:$0xff]
              %245 = vst [vmem:[%s243] sm:$0xff] %v244
              %v246 = vld [vmem:[%s242 + $0x8] sm:$0xff]
              %247 = vst [vmem:[%s243 + $0x8] sm:$0xff] %v246
              %v248 = vld [vmem:[%s242 + $0x10] sm:$0xff]
              %249 = vst [vmem:[%s243 + $0x10] sm:$0xff] %v248
              %v250 = vld [vmem:[%s242 + $0x18] sm:$0xff]
              %251 = vst [vmem:[%s243 + $0x18] sm:$0xff] %v250
              %v252 = vld [vmem:[%s242 + $0x20] sm:$0xff]
              %253 = vst [vmem:[%s243 + $0x20] sm:$0xff] %v252
              %v254 = vld [vmem:[%s242 + $0x28] sm:$0xff]
              %255 = vst [vmem:[%s243 + $0x28] sm:$0xff] %v254
              %v256 = vld [vmem:[%s242 + $0x30] sm:$0xff]
              %257 = vst [vmem:[%s243 + $0x30] sm:$0xff] %v256
              %v258 = vld [vmem:[%s242 + $0x38] sm:$0xff]
              %259 = vst [vmem:[%s243 + $0x38] sm:$0xff] %v258
              %v260 = vld [vmem:[%s242 + $0x40] sm:$0xff]
              %261 = vst [vmem:[%s243 + $0x40] sm:$0xff] %v260
              %v262 = vld [vmem:[%s242 + $0x48] sm:$0xff]
              %263 = vst [vmem:[%s243 + $0x48] sm:$0xff] %v262
              %v264 = vld [vmem:[%s242 + $0x50] sm:$0xff]
              %265 = vst [vmem:[%s243 + $0x50] sm:$0xff] %v264
              %v266 = vld [vmem:[%s242 + $0x58] sm:$0xff]
              %267 = vst [vmem:[%s243 + $0x58] sm:$0xff] %v266
              %v268 = vld [vmem:[%s242 + $0x60] sm:$0xff]
              %269 = vst [vmem:[%s243 + $0x60] sm:$0xff] %v268
              %v270 = vld [vmem:[%s242 + $0x68] sm:$0xff]
              %271 = vst [vmem:[%s243 + $0x68] sm:$0xff] %v270
              %v272 = vld [vmem:[%s242 + $0x70] sm:$0xff]
              %273 = vst [vmem:[%s243 + $0x70] sm:$0xff] %v272
              %v274 = vld [vmem:[%s242 + $0x78] sm:$0xff]
              %275 = vst [vmem:[%s243 + $0x78] sm:$0xff] %v274
            $region52: #{search_transfer.1} parent=46 // loop_footer
              %s241 = sadd.s32 1, %s237
            $region53: #{search_transfer.1} parent=46 // loop_footer_branch
              %236 = sbr.rel target = $region49
            $region54: #{search_transfer.1} parent=46 // loop_exit
              _
          $region47: #{search_transfer.1} parent=31 // pred_fallthru
            _
          %p276 = pneg %p232
          // Predicated region
          $region55: #{search_transfer.1} parent=31 // pred_check
            _
          $region56: #{search_transfer.1} parent=31 // pred_check_branch
            %278 = sbr.rel (%p232) target = $region58
          $region57: #{search_transfer.1} parent=31 // pred_region
            %s279 = sand.u32 128, 7
          $region58: #{search_transfer.1} parent=31 // pred_fallthru
            _
        $region32: #{search_transfer.1} parent=27 // pred_fallthru
          _
        // Predicated region
        $region33: #{search_transfer.1} parent=27 // pred_check
          %p217 = pneg %p213
        $region34: #{search_transfer.1} parent=27 // pred_check_branch
          %219 = sbr.rel (%p217) target = $region36
        $region35: #{search_transfer.1} parent=27 // pred_region
          %s220 = sshllo.u32 0, 128
          loop: start=0, step=1, limit=1
          $region37: #{search_transfer.1} parent=35 // loop_pre_header
            _
          $region38: #{search_transfer.1} parent=35 // loop_header
            %s222 = sphi 0, %s226
            %p223 = scmp.ge.s32.totalorder %s222, 1
            %s227 = sphi %s211, %s211
            %s228 = sphi [#allocation2], [#allocation2]
          $region39: #{search_transfer.1} parent=35 // loop_header_branch
            %225 = sbr.rel (%p223) target = $region43
          $region40: #{search_transfer.1} parent=35 // loop_body
            %v229 = vld [vmem:[%s227] sm:%s220]
            %230 = vst [vmem:[%s228] sm:%s220] %v229
          $region41: #{search_transfer.1} parent=35 // loop_footer
            %s226 = sadd.s32 1, %s222
          $region42: #{search_transfer.1} parent=35 // loop_footer_branch
            %221 = sbr.rel target = $region38
          $region43: #{search_transfer.1} parent=35 // loop_exit
            _
        $region36: #{search_transfer.1} parent=27 // pred_fallthru
          _
        // Predicated region
        $region59: #{search_transfer.1} parent=27 // pred_check
          _
        $region60: #{search_transfer.1} parent=27 // pred_check_branch
          %282 = sbr.rel (0) target = $region62
        $region61: #{search_transfer.1} parent=27 // pred_region
          %283 = vsyncadd [#allocation3], 2048
        $region62: #{search_transfer.1} parent=27 // pred_fallthru
          _
        %s284 = smul.u32 4, 32
        %s285 = smul.u32 %s284, 1
        %s286 = sshll.u32 %s285, 4
        %287 = dma.done [#allocation3], %s286
      $region28: #{search_transfer.1} parent=23 // pred_fallthru
        _
      %v288 = vld [vmem:[%s184] sm:$0xff]
      %v289 = vld [vmem:[%s184 + $0x8] sm:$0xff]
      %v290 = vld [vmem:[%s184 + $0x10] sm:$0xff]
      %v291 = vld [vmem:[%s184 + $0x18] sm:$0xff]
      %v292 = vld [vmem:[%s184 + $0x20] sm:$0xff]
      %v293 = vld [vmem:[%s184 + $0x28] sm:$0xff]
      %v294 = vld [vmem:[%s184 + $0x30] sm:$0xff]
      %v295 = vld [vmem:[%s184 + $0x38] sm:$0xff]
      %v296 = vld [vmem:[%s184 + $0x40] sm:$0xff]
      %v297 = vld [vmem:[%s184 + $0x48] sm:$0xff]
      %v298 = vld [vmem:[%s184 + $0x50] sm:$0xff]
      %v299 = vld [vmem:[%s184 + $0x58] sm:$0xff]
      %v300 = vld [vmem:[%s184 + $0x60] sm:$0xff]
      %v301 = vld [vmem:[%s184 + $0x68] sm:$0xff]
      %v302 = vld [vmem:[%s184 + $0x70] sm:$0xff]
      %v303 = vld [vmem:[%s184 + $0x78] sm:$0xff]
      %v304 = vlaneseq
      %v305 = vshrl.u32 %v304, 7
      %v306 = vadd.s32 %v305, 8
      %v307 = vadd.s32 %v305, 16
      %v308 = vadd.s32 %v305, 24
      %v309 = vadd.s32 %v305, 32
      %v310 = vadd.s32 %v305, 40
      %v311 = vadd.s32 %v305, 48
      %v312 = vadd.s32 %v305, 56
      %v313 = vadd.s32 %v305, 64
      %v314 = vadd.s32 %v305, 72
      %v315 = vadd.s32 %v305, 80
      %v316 = vadd.s32 %v305, 88
      %v317 = vadd.s32 %v305, 96
      %v318 = vadd.s32 %v305, 104
      %v319 = vadd.s32 %v305, 112
      %v320 = vadd.s32 %v305, 120
      %v321 = vadd.s32 %v305, 128
      %v322 = vadd.s32 %v305, 136
      %v323 = vadd.s32 %v305, 144
      %v324 = vadd.s32 %v305, 152
      %v325 = vadd.s32 %v305, 160
      %v326 = vadd.s32 %v305, 168
      %v327 = vadd.s32 %v305, 176
      %v328 = vadd.s32 %v305, 184
      %v329 = vadd.s32 %v305, 192
      %v330 = vadd.s32 %v305, 200
      %v331 = vadd.s32 %v305, 208
      %v332 = vadd.s32 %v305, 216
      %v333 = vadd.s32 %v305, 224
      %v334 = vadd.s32 %v305, 232
      %v335 = vadd.s32 %v305, 240
      %v336 = vadd.s32 %v305, 248
      %v337 = vld [vmem:[#allocation2] sm:$0xff]
      %v338 = vld [vmem:[#allocation2 + $0x8] sm:$0xff]
      %v339 = vld [vmem:[#allocation2 + $0x10] sm:$0xff]
      %v340 = vld [vmem:[#allocation2 + $0x18] sm:$0xff]
      %v341 = vld [vmem:[#allocation2 + $0x20] sm:$0xff]
      %v342 = vld [vmem:[#allocation2 + $0x28] sm:$0xff]
      %v343 = vld [vmem:[#allocation2 + $0x30] sm:$0xff]
      %v344 = vld [vmem:[#allocation2 + $0x38] sm:$0xff]
      %v345 = vld [vmem:[#allocation2 + $0x40] sm:$0xff]
      %v346 = vld [vmem:[#allocation2 + $0x48] sm:$0xff]
      %v347 = vld [vmem:[#allocation2 + $0x50] sm:$0xff]
      %v348 = vld [vmem:[#allocation2 + $0x58] sm:$0xff]
      %v349 = vld [vmem:[#allocation2 + $0x60] sm:$0xff]
      %v350 = vld [vmem:[#allocation2 + $0x68] sm:$0xff]
      %v351 = vld [vmem:[#allocation2 + $0x70] sm:$0xff]
      %v352 = vld [vmem:[#allocation2 + $0x78] sm:$0xff]
      %v369 = vunpack.c.l.b16 %v288
      %v370 = vunpack.c.h.b16 %v288
      %v371 = vunpack.c.l.b16 %v289
      %v372 = vunpack.c.h.b16 %v289
      %v373 = vunpack.c.l.b16 %v290
      %v374 = vunpack.c.h.b16 %v290
      %v375 = vunpack.c.l.b16 %v291
      %v376 = vunpack.c.h.b16 %v291
      %v377 = vunpack.c.l.b16 %v292
      %v378 = vunpack.c.h.b16 %v292
      %v379 = vunpack.c.l.b16 %v293
      %v380 = vunpack.c.h.b16 %v293
      %v381 = vunpack.c.l.b16 %v294
      %v382 = vunpack.c.h.b16 %v294
      %v383 = vunpack.c.l.b16 %v295
      %v384 = vunpack.c.h.b16 %v295
      %v385 = vunpack.c.l.b16 %v296
      %v386 = vunpack.c.h.b16 %v296
      %v387 = vunpack.c.l.b16 %v297
      %v388 = vunpack.c.h.b16 %v297
      %v389 = vunpack.c.l.b16 %v298
      %v390 = vunpack.c.h.b16 %v298
      %v391 = vunpack.c.l.b16 %v299
      %v392 = vunpack.c.h.b16 %v299
      %v393 = vunpack.c.l.b16 %v300
      %v394 = vunpack.c.h.b16 %v300
      %v395 = vunpack.c.l.b16 %v301
      %v396 = vunpack.c.h.b16 %v301
      %v397 = vunpack.c.l.b16 %v302
      %v398 = vunpack.c.h.b16 %v302
      %v399 = vunpack.c.l.b16 %v303
      %v400 = vunpack.c.h.b16 %v303
      %v401 = vpack.c.b16 %v371, %v369
      %v402 = vpack.c.b16 %v372, %v370
      %v403 = vpack.c.b16 %v375, %v373
      %v404 = vpack.c.b16 %v376, %v374
      %v405 = vpack.c.b16 %v379, %v377
      %v406 = vpack.c.b16 %v380, %v378
      %v407 = vpack.c.b16 %v383, %v381
      %v408 = vpack.c.b16 %v384, %v382
      %v409 = vpack.c.b16 %v387, %v385
      %v410 = vpack.c.b16 %v388, %v386
      %v411 = vpack.c.b16 %v391, %v389
      %v412 = vpack.c.b16 %v392, %v390
      %v413 = vpack.c.b16 %v395, %v393
      %v414 = vpack.c.b16 %v396, %v394
      %v415 = vpack.c.b16 %v399, %v397
      %v416 = vpack.c.b16 %v400, %v398
      %433 = vmatprep.subr.bf16.mxu0 %v402
      %434 = vmatpush1.bf16.msra.mxu0 %v401
      %435 = vmatprep.subr.bf16.mxu0 %v404
      %436 = vmatpush1.bf16.msra.mxu0 %v403
      %437 = vmatprep.subr.bf16.mxu0 %v406
      %438 = vmatpush1.bf16.msra.mxu0 %v405
      %439 = vmatprep.subr.bf16.mxu0 %v408
      %440 = vmatpush1.bf16.msra.mxu0 %v407
      %441 = vmatprep.subr.bf16.mxu0 %v410
      %442 = vmatpush1.bf16.msra.mxu0 %v409
      %443 = vmatprep.subr.bf16.mxu0 %v412
      %444 = vmatpush1.bf16.msra.mxu0 %v411
      %445 = vmatprep.subr.bf16.mxu0 %v414
      %446 = vmatpush1.bf16.msra.mxu0 %v413
      %447 = vmatprep.subr.bf16.mxu0 %v416
      %448 = vmatpush1.bf16.msra.mxu0 %v415
      %449 = vmatprep.subr.bf16.mxu0 0
      %450 = vmatpush1.bf16.msra.mxu0 0
      %451 = vmatprep.subr.bf16.mxu0 0
      %452 = vmatpush1.bf16.msra.mxu0 0
      %453 = vmatprep.subr.bf16.mxu0 0
      %454 = vmatpush1.bf16.msra.mxu0 0
      %455 = vmatprep.subr.bf16.mxu0 0
      %456 = vmatpush1.bf16.msra.mxu0 0
      %457 = vmatprep.subr.bf16.mxu0 0
      %458 = vmatpush1.bf16.msra.mxu0 0
      %459 = vmatprep.subr.bf16.mxu0 0
      %460 = vmatpush1.bf16.msra.mxu0 0
      %461 = vmatprep.subr.bf16.mxu0 0
      %462 = vmatpush1.bf16.msra.mxu0 0
      %463 = vmatprep.subr.bf16.mxu0 0
      %464 = vmatpush1.bf16.msra.mxu0 0
      %465 = vmatprep.mubr.bf16.mxu0 0
      %466 = vmatmul.mubr.bf16.gmra.mrb[0].mxu0 %v337
      %v467 = vpop.f32.mrb[0].mxu0
      %v468 = vadd.f32 0.0, %v467
      %v469 = vpop.f32.mrb[0].mxu0
      %v470 = vadd.f32 0.0, %v469
      %v471 = vpop.f32.mrb[0].mxu0
      %v472 = vadd.f32 0.0, %v471
      %v473 = vpop.f32.mrb[0].mxu0
      %v474 = vadd.f32 0.0, %v473
      %475 = vmatprep.mubr.bf16.mxu0 0
      %476 = vmatmul.mubr.bf16.gmra.mrb[0].mxu0 %v338
      %v477 = vpop.f32.mrb[0].mxu0
      %v478 = vadd.f32 0.0, %v477
      %v479 = vpop.f32.mrb[0].mxu0
      %v480 = vadd.f32 0.0, %v479
      %v481 = vpop.f32.mrb[0].mxu0
      %v482 = vadd.f32 0.0, %v481
      %v483 = vpop.f32.mrb[0].mxu0
      %v484 = vadd.f32 0.0, %v483
      %485 = vmatprep.mubr.bf16.mxu0 0
      %486 = vmatmul.mubr.bf16.gmra.mrb[0].mxu0 %v339
      %v487 = vpop.f32.mrb[0].mxu0
      %v488 = vadd.f32 0.0, %v487
      %v489 = vpop.f32.mrb[0].mxu0
      %v490 = vadd.f32 0.0, %v489
      %v491 = vpop.f32.mrb[0].mxu0
      %v492 = vadd.f32 0.0, %v491
      %v493 = vpop.f32.mrb[0].mxu0
      %v494 = vadd.f32 0.0, %v493
      %495 = vmatprep.mubr.bf16.mxu0 0
      %496 = vmatmul.mubr.bf16.gmra.mrb[0].mxu0 %v340
      %v497 = vpop.f32.mrb[0].mxu0
      %v498 = vadd.f32 0.0, %v497
      %v499 = vpop.f32.mrb[0].mxu0
      %v500 = vadd.f32 0.0, %v499
      %v501 = vpop.f32.mrb[0].mxu0
      %v502 = vadd.f32 0.0, %v501
      %v503 = vpop.f32.mrb[0].mxu0
      %v504 = vadd.f32 0.0, %v503
      %505 = vmatprep.mubr.bf16.mxu0 0
      %506 = vmatmul.mubr.bf16.gmra.mrb[0].mxu0 %v341
      %v507 = vpop.f32.mrb[0].mxu0
      %v508 = vadd.f32 0.0, %v507
      %v509 = vpop.f32.mrb[0].mxu0
      %v510 = vadd.f32 0.0, %v509
      %v511 = vpop.f32.mrb[0].mxu0
      %v512 = vadd.f32 0.0, %v511
      %v513 = vpop.f32.mrb[0].mxu0
      %v514 = vadd.f32 0.0, %v513
      %515 = vmatprep.mubr.bf16.mxu0 0
      %516 = vmatmul.mubr.bf16.gmra.mrb[0].mxu0 %v342
      %v517 = vpop.f32.mrb[0].mxu0
      %v518 = vadd.f32 0.0, %v517
      %v519 = vpop.f32.mrb[0].mxu0
      %v520 = vadd.f32 0.0, %v519
      %v521 = vpop.f32.mrb[0].mxu0
      %v522 = vadd.f32 0.0, %v521
      %v523 = vpop.f32.mrb[0].mxu0
      %v524 = vadd.f32 0.0, %v523
      %525 = vmatprep.mubr.bf16.mxu0 0
      %526 = vmatmul.mubr.bf16.gmra.mrb[0].mxu0 %v343
      %v527 = vpop.f32.mrb[0].mxu0
      %v528 = vadd.f32 0.0, %v527
      %v529 = vpop.f32.mrb[0].mxu0
      %v530 = vadd.f32 0.0, %v529
      %v531 = vpop.f32.mrb[0].mxu0
      %v532 = vadd.f32 0.0, %v531
      %v533 = vpop.f32.mrb[0].mxu0
      %v534 = vadd.f32 0.0, %v533
      %535 = vmatprep.mubr.bf16.mxu0 0
      %536 = vmatmul.mubr.bf16.gmra.mrb[0].mxu0 %v344
      %v537 = vpop.f32.mrb[0].mxu0
      %v538 = vadd.f32 0.0, %v537
      %v539 = vpop.f32.mrb[0].mxu0
      %v540 = vadd.f32 0.0, %v539
      %v541 = vpop.f32.mrb[0].mxu0
      %v542 = vadd.f32 0.0, %v541
      %v543 = vpop.f32.mrb[0].mxu0
      %v544 = vadd.f32 0.0, %v543
      %545 = vmatprep.mubr.bf16.mxu0 0
      %546 = vmatmul.mubr.bf16.gmra.mrb[0].mxu0 %v345
      %v547 = vpop.f32.mrb[0].mxu0
      %v548 = vadd.f32 0.0, %v547
      %v549 = vpop.f32.mrb[0].mxu0
      %v550 = vadd.f32 0.0, %v549
      %v551 = vpop.f32.mrb[0].mxu0
      %v552 = vadd.f32 0.0, %v551
      %v553 = vpop.f32.mrb[0].mxu0
      %v554 = vadd.f32 0.0, %v553
      %555 = vmatprep.mubr.bf16.mxu0 0
      %556 = vmatmul.mubr.bf16.gmra.mrb[0].mxu0 %v346
      %v557 = vpop.f32.mrb[0].mxu0
      %v558 = vadd.f32 0.0, %v557
      %v559 = vpop.f32.mrb[0].mxu0
      %v560 = vadd.f32 0.0, %v559
      %v561 = vpop.f32.mrb[0].mxu0
      %v562 = vadd.f32 0.0, %v561
      %v563 = vpop.f32.mrb[0].mxu0
      %v564 = vadd.f32 0.0, %v563
      %565 = vmatprep.mubr.bf16.mxu0 0
      %566 = vmatmul.mubr.bf16.gmra.mrb[0].mxu0 %v347
      %v567 = vpop.f32.mrb[0].mxu0
      %v568 = vadd.f32 0.0, %v567
      %v569 = vpop.f32.mrb[0].mxu0
      %v570 = vadd.f32 0.0, %v569
      %v571 = vpop.f32.mrb[0].mxu0
      %v572 = vadd.f32 0.0, %v571
      %v573 = vpop.f32.mrb[0].mxu0
      %v574 = vadd.f32 0.0, %v573
      %575 = vmatprep.mubr.bf16.mxu0 0
      %576 = vmatmul.mubr.bf16.gmra.mrb[0].mxu0 %v348
      %v577 = vpop.f32.mrb[0].mxu0
      %v578 = vadd.f32 0.0, %v577
      %v579 = vpop.f32.mrb[0].mxu0
      %v580 = vadd.f32 0.0, %v579
      %v581 = vpop.f32.mrb[0].mxu0
      %v582 = vadd.f32 0.0, %v581
      %v583 = vpop.f32.mrb[0].mxu0
      %v584 = vadd.f32 0.0, %v583
      %585 = vmatprep.mubr.bf16.mxu0 0
      %586 = vmatmul.mubr.bf16.gmra.mrb[0].mxu0 %v349
      %v587 = vpop.f32.mrb[0].mxu0
      %v588 = vadd.f32 0.0, %v587
      %v589 = vpop.f32.mrb[0].mxu0
      %v590 = vadd.f32 0.0, %v589
      %v591 = vpop.f32.mrb[0].mxu0
      %v592 = vadd.f32 0.0, %v591
      %v593 = vpop.f32.mrb[0].mxu0
      %v594 = vadd.f32 0.0, %v593
      %595 = vmatprep.mubr.bf16.mxu0 0
      %596 = vmatmul.mubr.bf16.gmra.mrb[0].mxu0 %v350
      %v597 = vpop.f32.mrb[0].mxu0
      %v598 = vadd.f32 0.0, %v597
      %v599 = vpop.f32.mrb[0].mxu0
      %v600 = vadd.f32 0.0, %v599
      %v601 = vpop.f32.mrb[0].mxu0
      %v602 = vadd.f32 0.0, %v601
      %v603 = vpop.f32.mrb[0].mxu0
      %v604 = vadd.f32 0.0, %v603
      %605 = vmatprep.mubr.bf16.mxu0 0
      %606 = vmatmul.mubr.bf16.gmra.mrb[0].mxu0 %v351
      %v607 = vpop.f32.mrb[0].mxu0
      %v608 = vadd.f32 0.0, %v607
      %v609 = vpop.f32.mrb[0].mxu0
      %v610 = vadd.f32 0.0, %v609
      %v611 = vpop.f32.mrb[0].mxu0
      %v612 = vadd.f32 0.0, %v611
      %v613 = vpop.f32.mrb[0].mxu0
      %v614 = vadd.f32 0.0, %v613
      %615 = vmatprep.mubr.bf16.mxu0 0
      %616 = vmatmul.mubr.bf16.gmra.mrb[0].mxu0 %v352
      %v617 = vpop.f32.mrb[0].mxu0
      %v618 = vadd.f32 0.0, %v617
      %v619 = vpop.f32.mrb[0].mxu0
      %v620 = vadd.f32 0.0, %v619
      %v621 = vpop.f32.mrb[0].mxu0
      %v622 = vadd.f32 0.0, %v621
      %v623 = vpop.f32.mrb[0].mxu0
      %v624 = vadd.f32 0.0, %v623
      %625 = vdwg.mxu0
      %v626 = vmax.f32 %v468, %v478
      %v627 = vmax.f32 %v472, %v482
      %v628 = vmax.f32 %v626, %v488
      %v629 = vmax.f32 %v627, %v492
      %v630 = vmax.f32 %v628, %v498
      %v631 = vmax.f32 %v629, %v502
      %v632 = vmax.f32 %v630, %v508
      %v633 = vmax.f32 %v631, %v512
      %v634 = vmax.f32 %v632, %v518
      %v635 = vmax.f32 %v633, %v522
      %v636 = vmax.f32 %v634, %v528
      %v637 = vmax.f32 %v635, %v532
      %v638 = vmax.f32 %v636, %v538
      %v639 = vmax.f32 %v637, %v542
      %v640 = vmax.f32 %v638, %v548
      %v641 = vmax.f32 %v639, %v552
      %v642 = vmax.f32 %v640, %v558
      %v643 = vmax.f32 %v641, %v562
      %v644 = vmax.f32 %v642, %v568
      %v645 = vmax.f32 %v643, %v572
      %v646 = vmax.f32 %v644, %v578
      %v647 = vmax.f32 %v645, %v582
      %v648 = vmax.f32 %v646, %v588
      %v649 = vmax.f32 %v647, %v592
      %v650 = vmax.f32 %v648, %v598
      %v651 = vmax.f32 %v649, %v602
      %v652 = vmax.f32 %v650, %v608
      %v653 = vmax.f32 %v651, %v612
      %v654 = vmax.f32 %v652, %v618
      %v655 = vmax.f32 %v653, %v622
      %v656 = vmax.f32 %v654, %v655
      %v657 = vrot.slane %v656, 4
      %v658 = vmax.f32 %v656, %v657
      %v659 = vrot.slane %v658, 2
      %v660 = vmax.f32 %v658, %v659
      %v661 = vrot.slane %v660, 1
      %v662 = vmax.f32 %v660, %v661
      %v663 = vmax.f32 %v470, %v480
      %v664 = vmax.f32 %v474, %v484
      %v665 = vmax.f32 %v663, %v490
      %v666 = vmax.f32 %v664, %v494
      %v667 = vmax.f32 %v665, %v500
      %v668 = vmax.f32 %v666, %v504
      %v669 = vmax.f32 %v667, %v510
      %v670 = vmax.f32 %v668, %v514
      %v671 = vmax.f32 %v669, %v520
      %v672 = vmax.f32 %v670, %v524
      %v673 = vmax.f32 %v671, %v530
      %v674 = vmax.f32 %v672, %v534
      %v675 = vmax.f32 %v673, %v540
      %v676 = vmax.f32 %v674, %v544
      %v677 = vmax.f32 %v675, %v550
      %v678 = vmax.f32 %v676, %v554
      %v679 = vmax.f32 %v677, %v560
      %v680 = vmax.f32 %v678, %v564
      %v681 = vmax.f32 %v679, %v570
      %v682 = vmax.f32 %v680, %v574
      %v683 = vmax.f32 %v681, %v580
      %v684 = vmax.f32 %v682, %v584
      %v685 = vmax.f32 %v683, %v590
      %v686 = vmax.f32 %v684, %v594
      %v687 = vmax.f32 %v685, %v600
      %v688 = vmax.f32 %v686, %v604
      %v689 = vmax.f32 %v687, %v610
      %v690 = vmax.f32 %v688, %v614
      %v691 = vmax.f32 %v689, %v620
      %v692 = vmax.f32 %v690, %v624
      %v693 = vmax.f32 %v691, %v692
      %v694 = vrot.slane %v693, 4
      %v695 = vmax.f32 %v693, %v694
      %v696 = vrot.slane %v695, 2
      %v697 = vmax.f32 %v695, %v696
      %v698 = vrot.slane %v697, 1
      %v699 = vmax.f32 %v697, %v698
      %vm700 = vcmp.eq.f32.partialorder %v468, %v662
      %vm701 = vcmp.eq.f32.partialorder %v470, %v699
      %vm702 = vcmp.eq.f32.partialorder %v472, %v662
      %vm703 = vcmp.eq.f32.partialorder %v474, %v699
      %vm704 = vcmp.eq.f32.partialorder %v478, %v662
      %vm705 = vcmp.eq.f32.partialorder %v480, %v699
      %vm706 = vcmp.eq.f32.partialorder %v482, %v662
      %vm707 = vcmp.eq.f32.partialorder %v484, %v699
      %vm708 = vcmp.eq.f32.partialorder %v488, %v662
      %vm709 = vcmp.eq.f32.partialorder %v490, %v699
      %vm710 = vcmp.eq.f32.partialorder %v492, %v662
      %vm711 = vcmp.eq.f32.partialorder %v494, %v699
      %vm712 = vcmp.eq.f32.partialorder %v498, %v662
      %vm713 = vcmp.eq.f32.partialorder %v500, %v699
      %vm714 = vcmp.eq.f32.partialorder %v502, %v662
      %vm715 = vcmp.eq.f32.partialorder %v504, %v699
      %vm716 = vcmp.eq.f32.partialorder %v508, %v662
      %vm717 = vcmp.eq.f32.partialorder %v510, %v699
      %vm718 = vcmp.eq.f32.partialorder %v512, %v662
      %vm719 = vcmp.eq.f32.partialorder %v514, %v699
      %vm720 = vcmp.eq.f32.partialorder %v518, %v662
      %vm721 = vcmp.eq.f32.partialorder %v520, %v699
      %vm722 = vcmp.eq.f32.partialorder %v522, %v662
      %vm723 = vcmp.eq.f32.partialorder %v524, %v699
      %vm724 = vcmp.eq.f32.partialorder %v528, %v662
      %vm725 = vcmp.eq.f32.partialorder %v530, %v699
      %vm726 = vcmp.eq.f32.partialorder %v532, %v662
      %vm727 = vcmp.eq.f32.partialorder %v534, %v699
      %vm728 = vcmp.eq.f32.partialorder %v538, %v662
      %vm729 = vcmp.eq.f32.partialorder %v540, %v699
      %vm730 = vcmp.eq.f32.partialorder %v542, %v662
      %vm731 = vcmp.eq.f32.partialorder %v544, %v699
      %vm732 = vcmp.eq.f32.partialorder %v548, %v662
      %vm733 = vcmp.eq.f32.partialorder %v550, %v699
      %vm734 = vcmp.eq.f32.partialorder %v552, %v662
      %vm735 = vcmp.eq.f32.partialorder %v554, %v699
      %vm736 = vcmp.eq.f32.partialorder %v558, %v662
      %vm737 = vcmp.eq.f32.partialorder %v560, %v699
      %vm738 = vcmp.eq.f32.partialorder %v562, %v662
      %vm739 = vcmp.eq.f32.partialorder %v564, %v699
      %vm740 = vcmp.eq.f32.partialorder %v568, %v662
      %vm741 = vcmp.eq.f32.partialorder %v570, %v699
      %vm742 = vcmp.eq.f32.partialorder %v572, %v662
      %vm743 = vcmp.eq.f32.partialorder %v574, %v699
      %vm744 = vcmp.eq.f32.partialorder %v578, %v662
      %vm745 = vcmp.eq.f32.partialorder %v580, %v699
      %vm746 = vcmp.eq.f32.partialorder %v582, %v662
      %vm747 = vcmp.eq.f32.partialorder %v584, %v699
      %vm748 = vcmp.eq.f32.partialorder %v588, %v662
      %vm749 = vcmp.eq.f32.partialorder %v590, %v699
      %vm750 = vcmp.eq.f32.partialorder %v592, %v662
      %vm751 = vcmp.eq.f32.partialorder %v594, %v699
      %vm752 = vcmp.eq.f32.partialorder %v598, %v662
      %vm753 = vcmp.eq.f32.partialorder %v600, %v699
      %vm754 = vcmp.eq.f32.partialorder %v602, %v662
      %vm755 = vcmp.eq.f32.partialorder %v604, %v699
      %vm756 = vcmp.eq.f32.partialorder %v608, %v662
      %vm757 = vcmp.eq.f32.partialorder %v610, %v699
      %vm758 = vcmp.eq.f32.partialorder %v612, %v662
      %vm759 = vcmp.eq.f32.partialorder %v614, %v699
      %vm760 = vcmp.eq.f32.partialorder %v618, %v662
      %vm761 = vcmp.eq.f32.partialorder %v620, %v699
      %vm762 = vcmp.eq.f32.partialorder %v622, %v662
      %vm763 = vcmp.eq.f32.partialorder %v624, %v699
      %v764 = vsel %vm700, %v305, 2147483647
      %v765 = vsel %vm701, %v305, 2147483647
      %v766 = vsel %vm702, %v306, 2147483647
      %v767 = vsel %vm703, %v306, 2147483647
      %v768 = vsel %vm704, %v307, 2147483647
      %v769 = vsel %vm705, %v307, 2147483647
      %v770 = vsel %vm706, %v308, 2147483647
      %v771 = vsel %vm707, %v308, 2147483647
      %v772 = vsel %vm708, %v309, 2147483647
      %v773 = vsel %vm709, %v309, 2147483647
      %v774 = vsel %vm710, %v310, 2147483647
      %v775 = vsel %vm711, %v310, 2147483647
      %v776 = vsel %vm712, %v311, 2147483647
      %v777 = vsel %vm713, %v311, 2147483647
      %v778 = vsel %vm714, %v312, 2147483647
      %v779 = vsel %vm715, %v312, 2147483647
      %v780 = vsel %vm716, %v313, 2147483647
      %v781 = vsel %vm717, %v313, 2147483647
      %v782 = vsel %vm718, %v314, 2147483647
      %v783 = vsel %vm719, %v314, 2147483647
      %v784 = vsel %vm720, %v315, 2147483647
      %v785 = vsel %vm721, %v315, 2147483647
      %v786 = vsel %vm722, %v316, 2147483647
      %v787 = vsel %vm723, %v316, 2147483647
      %v788 = vsel %vm724, %v317, 2147483647
      %v789 = vsel %vm725, %v317, 2147483647
      %v790 = vsel %vm726, %v318, 2147483647
      %v791 = vsel %vm727, %v318, 2147483647
      %v792 = vsel %vm728, %v319, 2147483647
      %v793 = vsel %vm729, %v319, 2147483647
      %v794 = vsel %vm730, %v320, 2147483647
      %v795 = vsel %vm731, %v320, 2147483647
      %v796 = vsel %vm732, %v321, 2147483647
      %v797 = vsel %vm733, %v321, 2147483647
      %v798 = vsel %vm734, %v322, 2147483647
      %v799 = vsel %vm735, %v322, 2147483647
      %v800 = vsel %vm736, %v323, 2147483647
      %v801 = vsel %vm737, %v323, 2147483647
      %v802 = vsel %vm738, %v324, 2147483647
      %v803 = vsel %vm739, %v324, 2147483647
      %v804 = vsel %vm740, %v325, 2147483647
      %v805 = vsel %vm741, %v325, 2147483647
      %v806 = vsel %vm742, %v326, 2147483647
      %v807 = vsel %vm743, %v326, 2147483647
      %v808 = vsel %vm744, %v327, 2147483647
      %v809 = vsel %vm745, %v327, 2147483647
      %v810 = vsel %vm746, %v328, 2147483647
      %v811 = vsel %vm747, %v328, 2147483647
      %v812 = vsel %vm748, %v329, 2147483647
      %v813 = vsel %vm749, %v329, 2147483647
      %v814 = vsel %vm750, %v330, 2147483647
      %v815 = vsel %vm751, %v330, 2147483647
      %v816 = vsel %vm752, %v331, 2147483647
      %v817 = vsel %vm753, %v331, 2147483647
      %v818 = vsel %vm754, %v332, 2147483647
      %v819 = vsel %vm755, %v332, 2147483647
      %v820 = vsel %vm756, %v333, 2147483647
      %v821 = vsel %vm757, %v333, 2147483647
      %v822 = vsel %vm758, %v334, 2147483647
      %v823 = vsel %vm759, %v334, 2147483647
      %v824 = vsel %vm760, %v335, 2147483647
      %v825 = vsel %vm761, %v335, 2147483647
      %v826 = vsel %vm762, %v336, 2147483647
      %v827 = vsel %vm763, %v336, 2147483647
      %vm828 = vcmp.lt.s32.totalorder %v764, %v768
      %v829 = vsel %vm828, %v764, %v768
      %vm830 = vcmp.lt.s32.totalorder %v766, %v770
      %v831 = vsel %vm830, %v766, %v770
      %vm832 = vcmp.lt.s32.totalorder %v829, %v772
      %v833 = vsel %vm832, %v829, %v772
      %vm834 = vcmp.lt.s32.totalorder %v831, %v774
      %v835 = vsel %vm834, %v831, %v774
      %vm836 = vcmp.lt.s32.totalorder %v833, %v776
      %v837 = vsel %vm836, %v833, %v776
      %vm838 = vcmp.lt.s32.totalorder %v835, %v778
      %v839 = vsel %vm838, %v835, %v778
      %vm840 = vcmp.lt.s32.totalorder %v837, %v780
      %v841 = vsel %vm840, %v837, %v780
      %vm842 = vcmp.lt.s32.totalorder %v839, %v782
      %v843 = vsel %vm842, %v839, %v782
      %vm844 = vcmp.lt.s32.totalorder %v841, %v784
      %v845 = vsel %vm844, %v841, %v784
      %vm846 = vcmp.lt.s32.totalorder %v843, %v786
      %v847 = vsel %vm846, %v843, %v786
      %vm848 = vcmp.lt.s32.totalorder %v845, %v788
      %v849 = vsel %vm848, %v845, %v788
      %vm850 = vcmp.lt.s32.totalorder %v847, %v790
      %v851 = vsel %vm850, %v847, %v790
      %vm852 = vcmp.lt.s32.totalorder %v849, %v792
      %v853 = vsel %vm852, %v849, %v792
      %vm854 = vcmp.lt.s32.totalorder %v851, %v794
      %v855 = vsel %vm854, %v851, %v794
      %vm856 = vcmp.lt.s32.totalorder %v853, %v796
      %v857 = vsel %vm856, %v853, %v796
      %vm858 = vcmp.lt.s32.totalorder %v855, %v798
      %v859 = vsel %vm858, %v855, %v798
      %vm860 = vcmp.lt.s32.totalorder %v857, %v800
      %v861 = vsel %vm860, %v857, %v800
      %vm862 = vcmp.lt.s32.totalorder %v859, %v802
      %v863 = vsel %vm862, %v859, %v802
      %vm864 = vcmp.lt.s32.totalorder %v861, %v804
      %v865 = vsel %vm864, %v861, %v804
      %vm866 = vcmp.lt.s32.totalorder %v863, %v806
      %v867 = vsel %vm866, %v863, %v806
      %vm868 = vcmp.lt.s32.totalorder %v865, %v808
      %v869 = vsel %vm868, %v865, %v808
      %vm870 = vcmp.lt.s32.totalorder %v867, %v810
      %v871 = vsel %vm870, %v867, %v810
      %vm872 = vcmp.lt.s32.totalorder %v869, %v812
      %v873 = vsel %vm872, %v869, %v812
      %vm874 = vcmp.lt.s32.totalorder %v871, %v814
      %v875 = vsel %vm874, %v871, %v814
      %vm876 = vcmp.lt.s32.totalorder %v873, %v816
      %v877 = vsel %vm876, %v873, %v816
      %vm878 = vcmp.lt.s32.totalorder %v875, %v818
      %v879 = vsel %vm878, %v875, %v818
      %vm880 = vcmp.lt.s32.totalorder %v877, %v820
      %v881 = vsel %vm880, %v877, %v820
      %vm882 = vcmp.lt.s32.totalorder %v879, %v822
      %v883 = vsel %vm882, %v879, %v822
      %vm884 = vcmp.lt.s32.totalorder %v881, %v824
      %v885 = vsel %vm884, %v881, %v824
      %vm886 = vcmp.lt.s32.totalorder %v883, %v826
      %v887 = vsel %vm886, %v883, %v826
      %vm888 = vcmp.lt.s32.totalorder %v885, %v887
      %v889 = vsel %vm888, %v885, %v887
      %v890 = vrot.slane %v889, 4
      %vm891 = vcmp.lt.s32.totalorder %v889, %v890
      %v892 = vsel %vm891, %v889, %v890
      %v893 = vrot.slane %v892, 2
      %vm894 = vcmp.lt.s32.totalorder %v892, %v893
      %v895 = vsel %vm894, %v892, %v893
      %v896 = vrot.slane %v895, 1
      %vm897 = vcmp.lt.s32.totalorder %v895, %v896
      %v898 = vsel %vm897, %v895, %v896
      %vm899 = vcmp.lt.s32.totalorder %v765, %v769
      %v900 = vsel %vm899, %v765, %v769
      %vm901 = vcmp.lt.s32.totalorder %v767, %v771
      %v902 = vsel %vm901, %v767, %v771
      %vm903 = vcmp.lt.s32.totalorder %v900, %v773
      %v904 = vsel %vm903, %v900, %v773
      %vm905 = vcmp.lt.s32.totalorder %v902, %v775
      %v906 = vsel %vm905, %v902, %v775
      %vm907 = vcmp.lt.s32.totalorder %v904, %v777
      %v908 = vsel %vm907, %v904, %v777
      %vm909 = vcmp.lt.s32.totalorder %v906, %v779
      %v910 = vsel %vm909, %v906, %v779
      %vm911 = vcmp.lt.s32.totalorder %v908, %v781
      %v912 = vsel %vm911, %v908, %v781
      %vm913 = vcmp.lt.s32.totalorder %v910, %v783
      %v914 = vsel %vm913, %v910, %v783
      %vm915 = vcmp.lt.s32.totalorder %v912, %v785
      %v916 = vsel %vm915, %v912, %v785
      %vm917 = vcmp.lt.s32.totalorder %v914, %v787
      %v918 = vsel %vm917, %v914, %v787
      %vm919 = vcmp.lt.s32.totalorder %v916, %v789
      %v920 = vsel %vm919, %v916, %v789
      %vm921 = vcmp.lt.s32.totalorder %v918, %v791
      %v922 = vsel %vm921, %v918, %v791
      %vm923 = vcmp.lt.s32.totalorder %v920, %v793
      %v924 = vsel %vm923, %v920, %v793
      %vm925 = vcmp.lt.s32.totalorder %v922, %v795
      %v926 = vsel %vm925, %v922, %v795
      %vm927 = vcmp.lt.s32.totalorder %v924, %v797
      %v928 = vsel %vm927, %v924, %v797
      %vm929 = vcmp.lt.s32.totalorder %v926, %v799
      %v930 = vsel %vm929, %v926, %v799
      %vm931 = vcmp.lt.s32.totalorder %v928, %v801
      %v932 = vsel %vm931, %v928, %v801
      %vm933 = vcmp.lt.s32.totalorder %v930, %v803
      %v934 = vsel %vm933, %v930, %v803
      %vm935 = vcmp.lt.s32.totalorder %v932, %v805
      %v936 = vsel %vm935, %v932, %v805
      %vm937 = vcmp.lt.s32.totalorder %v934, %v807
      %v938 = vsel %vm937, %v934, %v807
      %vm939 = vcmp.lt.s32.totalorder %v936, %v809
      %v940 = vsel %vm939, %v936, %v809
      %vm941 = vcmp.lt.s32.totalorder %v938, %v811
      %v942 = vsel %vm941, %v938, %v811
      %vm943 = vcmp.lt.s32.totalorder %v940, %v813
      %v944 = vsel %vm943, %v940, %v813
      %vm945 = vcmp.lt.s32.totalorder %v942, %v815
      %v946 = vsel %vm945, %v942, %v815
      %vm947 = vcmp.lt.s32.totalorder %v944, %v817
      %v948 = vsel %vm947, %v944, %v817
      %vm949 = vcmp.lt.s32.totalorder %v946, %v819
      %v950 = vsel %vm949, %v946, %v819
      %vm951 = vcmp.lt.s32.totalorder %v948, %v821
      %v952 = vsel %vm951, %v948, %v821
      %vm953 = vcmp.lt.s32.totalorder %v950, %v823
      %v954 = vsel %vm953, %v950, %v823
      %vm955 = vcmp.lt.s32.totalorder %v952, %v825
      %v956 = vsel %vm955, %v952, %v825
      %vm957 = vcmp.lt.s32.totalorder %v954, %v827
      %v958 = vsel %vm957, %v954, %v827
      %vm959 = vcmp.lt.s32.totalorder %v956, %v958
      %v960 = vsel %vm959, %v956, %v958
      %v961 = vrot.slane %v960, 4
      %vm962 = vcmp.lt.s32.totalorder %v960, %v961
      %v963 = vsel %vm962, %v960, %v961
      %v964 = vrot.slane %v963, 2
      %vm965 = vcmp.lt.s32.totalorder %v963, %v964
      %v966 = vsel %vm965, %v963, %v964
      %v967 = vrot.slane %v966, 1
      %vm968 = vcmp.lt.s32.totalorder %v966, %v967
      %v969 = vsel %vm968, %v966, %v967
      %v970 = vstv 0
      %v971 = vadd.s32 %v898, %v970
      %v972 = vadd.s32 %v969, %v970
      %vm973 = vcmp.gt.f32.partialorder %v662, -inf
      %vm974 = vcmp.gt.f32.partialorder %v699, -inf
      %v975 = vsel %vm973, %v662, -inf
      %v976 = vsel %vm974, %v699, -inf
      %v977 = vsel %vm973, %v971, 0
      %v978 = vsel %vm974, %v972, 0
      %v981 = vcombine.low %v975, %v976
      %v983 = vunpack.c.l.s4 1966171168
      %v984 = vunpack.c.0.s8 %v983
      %v985 = vlaneseq
      %v986 = vshrl.u32 %v985, 7
      %v987 = vsub.s32 %v984, %v986
      %v988 = vrot.slane %v981, %v987
      %v990 = vunpack.c.l.s4 1966171168
      %v991 = vunpack.c.0.s8 %v990
      %v992 = vlaneseq
      %v993 = vshrl.u32 %v992, 7
      %v994 = vsub.s32 %v991, %v993
      %v995 = vrot.slane %v988, %v994
      %v997 = vlaneseq
      %vm998 = vcmp.ge.s32.totalorder %v997, 0
      %vm999 = vcmp.lt.s32.totalorder %v997, 256
      %vm1000 = vmand %vm998, %vm999
      %1001 = vst.msk [vmem:[%s193] sm:$0x3] %vm1000, %v995
      %v1002 = vcombine.low %v977, %v978
      %v1004 = vunpack.c.l.s4 1966171168
      %v1005 = vunpack.c.0.s8 %v1004
      %v1006 = vlaneseq
      %v1007 = vshrl.u32 %v1006, 7
      %v1008 = vsub.s32 %v1005, %v1007
      %v1009 = vrot.slane %v1002, %v1008
      %v1011 = vunpack.c.l.s4 1966171168
      %v1012 = vunpack.c.0.s8 %v1011
      %v1013 = vlaneseq
      %v1014 = vshrl.u32 %v1013, 7
      %v1015 = vsub.s32 %v1012, %v1014
      %v1016 = vrot.slane %v1009, %v1015
      %1017 = vst.msk [vmem:[%s202] sm:$0x3] %vm1000, %v1016
      %s1018 = smul.u32 2, %s20
      %p1019 = scmp.lt.s32.totalorder %s19, 1
      %s1020 = scalar_select %p1019, %s19, 1
      %p1021 = scmp.lt.s32.totalorder %s1018, 1
      %s1022 = scalar_select %p1021, %s1018, 1
      %s1023 = smul.addr %s1020, 2
      %s1024 = sadd.s32 %s1022, %s1023
      %s1025 = scalar_lea.vmem %s2, %s1024
      %s1026 = smul.u32 2, %s20
      %p1027 = scmp.lt.s32.totalorder %s19, 1
      %s1028 = scalar_select %p1027, %s19, 1
      %p1029 = scmp.lt.s32.totalorder %s1026, 1
      %s1030 = scalar_select %p1029, %s1026, 1
      %s1031 = smul.addr %s1028, 2
      %s1032 = sadd.s32 %s1030, %s1031
      %s1033 = scalar_lea.vmem %s3, %s1032
      // Predicated region
      $region63: #{search_transfer.1} parent=23 // pred_check
        %p1034 = pneg %p75
      $region64: #{search_transfer.1} parent=23 // pred_check_branch
        %1036 = sbr.rel (%p1034) target = $region66
      $region65: #{search_transfer.1} parent=23 // pred_region
        %s1037 = smul.u32 2, %s20
      $region66: #{search_transfer.1} parent=23 // pred_fallthru
        _
      // Predicated region
      $region67: #{search_transfer.1} parent=23 // pred_check
        %p1038 = pneg %p103
      $region68: #{search_transfer.1} parent=23 // pred_check_branch
        %1040 = sbr.rel (%p1038) target = $region70
      $region69: #{search_transfer.1} parent=23 // pred_region
        %s1041 = smul.u32 2, %s20
      $region70: #{search_transfer.1} parent=23 // pred_fallthru
        _
    $region24: #{search_transfer.1} parent=5 // pred_fallthru
      _
    %p1042 = scmp.le.s32.totalorder 2, %s10
    // Predicated region
    $region71: #{search_transfer.1} parent=5 // pred_check
      %p1043 = pneg %p1042
    $region72: #{search_transfer.1} parent=5 // pred_check_branch
      %1045 = sbr.rel (%p1043) target = $region74
    $region73: #{search_transfer.1} parent=5 // pred_region
      %s1046 = ssub.s32 %s10, 2
      // Predicated region
      $region75: #{search_transfer.1} parent=73 // pred_check
        %p1047 = pneg %p81
      $region76: #{search_transfer.1} parent=73 // pred_check_branch
        %1049 = sbr.rel (%p1047) target = $region78
      $region77: #{search_transfer.1} parent=73 // pred_region
        %s1050 = smul.u32 2, %s22
        %p1051 = scmp.lt.s32.totalorder %s21, 1
        %s1052 = scalar_select %p1051, %s21, 1
        %p1053 = scmp.lt.s32.totalorder %s1050, 1
        %s1054 = scalar_select %p1053, %s1050, 1
        %s1055 = smul.addr %s1052, 2
        %s1056 = sadd.s32 %s1054, %s1055
        %s1057 = scalar_lea.vmem %s2, %s1056
      $region78: #{search_transfer.1} parent=73 // pred_fallthru
        _
      // Predicated region
      $region79: #{search_transfer.1} parent=73 // pred_check
        %p1058 = pneg %p109
      $region80: #{search_transfer.1} parent=73 // pred_check_branch
        %1060 = sbr.rel (%p1058) target = $region82
      $region81: #{search_transfer.1} parent=73 // pred_region
        %s1061 = smul.u32 2, %s22
        %p1062 = scmp.lt.s32.totalorder %s21, 1
        %s1063 = scalar_select %p1062, %s21, 1
        %p1064 = scmp.lt.s32.totalorder %s1061, 1
        %s1065 = scalar_select %p1064, %s1061, 1
        %s1066 = smul.addr %s1063, 2
        %s1067 = sadd.s32 %s1065, %s1066
        %s1068 = scalar_lea.vmem %s3, %s1067
      $region82: #{search_transfer.1} parent=73 // pred_fallthru
        _
    $region74: #{search_transfer.1} parent=5 // pred_fallthru
      _
  $region6: #{search_transfer.1} parent=0 // loop_footer
    %s14 = sadd.s32 1, %s10
  $region7: #{search_transfer.1} parent=0 // loop_footer_branch
    %9 = sbr.rel target = $region3
  $region8: #{search_transfer.1} parent=0 // loop_exit
    _
  %1069 = vsyncmov [#allocation3]
  %s1070 = vpop.sfrf %1069
  %p1071 = scmp.eq.s32.totalorder %s1070, 0
  %p1072 = pneg %p1071
  %1074 = shalt.err (%p1072)

// kernel: squeeze.379
$region0: #{squeeze.379}
  %s0 = inlined_call_operand.vmem [shape: f32[2,256], index: 0, kind: input, shape index: {}]
  %s1 = inlined_call_operand.hbm [shape: f32[2,1,16,16], index: 1, kind: output, shape index: {}]
  $region1: #{squeeze.379} parent=0
    #allocation0 [shape = 'u8[16384]{0}', space=vmem, size = 0x4000, scoped, tag = 'operand span for operand 1']
    #allocation1 [shape = 's32[1]{0}', space=sflag, size = 0x4, scoped, tag = 'scoped memory for squeeze.379']
    #allocation2 [shape = 'u8[8192]{0}', space=vmem, size = 0x2000, scoped, tag = 'scoped mem for input reshape']
    %2 = vsyncpa [#allocation1], 0
    %s4 = sshllo.u32 0, 2
    %s5 = scalar_lea.vmem %s0, 2
    %v6 = vld [vmem:[%s5] sm:%s4]
    %s7 = scalar_lea.vmem [#allocation2], 8
    %8 = vst [vmem:[%s7] sm:%s4] %v6
    %v9 = vld [vmem:[%s0] sm:%s4]
    %10 = vst [vmem:[#allocation2] sm:%s4] %v9
    %v11 = vld [vmem:[#allocation2] sm:$0x3]
    %vm12 = vcmask 130048
    %13 = vst.msk [vmem:[#allocation0] ss:$16 sm:$0x3] %vm12, %v11
    %s14 = scalar_lea.vmem [#allocation2], 8
    %v15 = vld [vmem:[%s14] sm:$0x3]
    %vm16 = vcmask 130048
    %s17 = scalar_lea.vmem [#allocation0], 8
    %18 = vst.msk [vmem:[%s17] ss:$16 sm:$0x3] %vm16, %v15
    %v19 = vld.sshfl [vmem:[#allocation2] sm:$0xff pattern:$0x99999180]
    %20 = vrot.lane.b32.xlu0 %v19, 112
    %v21 = vpop.permute.xlu0 %20
    %vm22 = vcmask 130048
    %s23 = scalar_lea.vmem [#allocation0], 1
    %24 = vst.msk [vmem:[%s23] ss:$8 sm:$0xf] %vm22, %v21
    %v25 = vld.sshfl [vmem:[#allocation2] sm:$0xff pattern:$0x99999180]
    %26 = vrot.lane.b32.xlu0 %v25, 96
    %v27 = vpop.permute.xlu0 %26
    %vm28 = vcmask 130048
    %s29 = scalar_lea.vmem [#allocation0], 2
    %30 = vst.msk [vmem:[%s29] ss:$8 sm:$0xf] %vm28, %v27
    %v31 = vld.sshfl [vmem:[#allocation2] sm:$0xff pattern:$0x99999180]
    %32 = vrot.lane.b32.xlu0 %v31, 80
    %v33 = vpop.permute.xlu0 %32
    %vm34 = vcmask 130048
    %s35 = scalar_lea.vmem [#allocation0], 3
    %36 = vst.msk [vmem:[%s35] ss:$8 sm:$0xf] %vm34, %v33
    %v37 = vld.sshfl [vmem:[#allocation2] sm:$0xff pattern:$0x99999180]
    %38 = vrot.lane.b32.xlu0 %v37, 64
    %v39 = vpop.permute.xlu0 %38
    %vm40 = vcmask 130048
    %s41 = scalar_lea.vmem [#allocation0], 4
    %42 = vst.msk [vmem:[%s41] ss:$8 sm:$0xf] %vm40, %v39
    %v43 = vld.sshfl [vmem:[#allocation2] sm:$0xff pattern:$0x99999180]
    %44 = vrot.lane.b32.xlu0 %v43, 48
    %v45 = vpop.permute.xlu0 %44
    %vm46 = vcmask 130048
    %s47 = scalar_lea.vmem [#allocation0], 5
    %48 = vst.msk [vmem:[%s47] ss:$8 sm:$0xf] %vm46, %v45
    %v49 = vld.sshfl [vmem:[#allocation2] sm:$0xff pattern:$0x99999180]
    %50 = vrot.lane.b32.xlu0 %v49, 32
    %v51 = vpop.permute.xlu0 %50
    %vm52 = vcmask 130048
    %s53 = scalar_lea.vmem [#allocation0], 6
    %54 = vst.msk [vmem:[%s53] ss:$8 sm:$0xf] %vm52, %v51
    %v55 = vld.sshfl [vmem:[#allocation2] sm:$0xff pattern:$0x99999180]
    %56 = vrot.lane.b32.xlu0 %v55, 16
    %v57 = vpop.permute.xlu0 %56
    %vm58 = vcmask 130048
    %s59 = scalar_lea.vmem [#allocation0], 7
    %60 = vst.msk [vmem:[%s59] ss:$8 sm:$0xf] %vm58, %v57
    %s62 = ssub.s32 512, 512
    %63 = vsyncadd [#allocation1], %s62
    %s65 = sshll.u32 [#allocation0], 4
    %s66 = int_to_ptr.vmem [resolvable:$true] %s65
    %68 = dma.vmem_to_hbm [thread:$0]  %s66, 512, %s1, [#allocation1]
    %69 = dma.done [#allocation1], 512
    %70 = vsyncpa [#allocation1], 1

</llo_original>
